<compile_context>
chip_gen: v7x
topology: tpu7x:2x2x1
jax: 0.10.0
libtpu: 0.0.40
codegen_flags: <defaults>
</compile_context>

<pallas_src>
import jax
import jax.numpy as jnp
from jax import lax
from jax.experimental import pallas as pl
from jax.experimental.pallas import tpu as pltpu


def _clip_boxes_kernel(bounds_ref, boxes_ref, out_ref):
    """bounds_ref: SMEM f32[2] = [W-1, H-1]; boxes_ref/out_ref: (tb, L) tile."""
    b = boxes_ref[...]
    w_max = bounds_ref[0]
    h_max = bounds_ref[1]

    # Column type of every lane (0->x1, 1->y1, 2->x2, 3->y2), built once as a
    # (1, L) row and broadcast against the tile in the min/max below.
    col = lax.broadcasted_iota(jnp.int32, (1, b.shape[-1]), dimension=1) & 3

    # Bounds in float32 (exact for integer W-1 / H-1); cast result at the end.
    lo = jnp.where(col < 2, 0.0, -jnp.inf)                       # x1, y1 >= 0
    hi = jnp.where(col == 2, w_max,
                   jnp.where(col == 3, h_max, jnp.inf))          # x2<=W-1, y2<=H-1

    clipped = jnp.minimum(jnp.maximum(b.astype(jnp.float32), lo), hi)
    out_ref[...] = clipped.astype(out_ref.dtype)


def clip_boxes(boxes, img, *, in_place=False):
    """boxes: (B, N, 4); img: (B, C, H, W). Returns clipped boxes.

    in_place=True aliases the flattened boxes buffer to the output
    (production path, when the caller discards the unclipped boxes).
    """
    B, N, four = boxes.shape
    assert four == 4
    H, W = img.shape[2], img.shape[3]

    dtype = boxes.dtype
    itemsize = jnp.dtype(dtype).itemsize
    total = B * N * 4

    # ---- Batch-independent lane-dense slab: (rows, L), L multiple of 512 ----
    L = 2048
    while L > 512 and total < L * 8:
        L //= 2
    rows = pl.cdiv(total, L)
    padded = rows * L
    if padded == total:
        flat = boxes.reshape(rows, L)
    else:
        flat = jnp.pad(boxes.reshape(-1), (0, padded - total)).reshape(rows, L)

    # ---- Row-block size: ~1 MiB tiles, >= 4-8 grid steps when possible ------
    tile_budget = 1 << 20                                     # 1 MiB per tile
    tb = max(8, (tile_budget // (L * itemsize)) & ~7)         # sublane-aligned
    min_steps = 8
    if rows >= min_steps * 8:
        tb = min(tb, max(8, (rows // min_steps) & ~7))        # >= 8 steps
    elif rows >= 32:
        tb = min(tb, max(8, (rows // 4) & ~7))                # >= 4 steps
    if tb >= rows:
        tb = rows                                             # tiny inputs only
    grid = (pl.cdiv(rows, tb),)            # tail block is masked by Pallas

    bounds = jnp.array([W - 1, H - 1], dtype=jnp.float32)     # runtime scalars

    out_flat = pl.pallas_call(
        _clip_boxes_kernel,
        out_shape=jax.ShapeDtypeStruct((rows, L), dtype),
        grid=grid,
        in_specs=[
            pl.BlockSpec(memory_space=pltpu.MemorySpace.SMEM),   # [W-1, H-1]
            pl.BlockSpec((tb, L), lambda i: (i, 0)),
        ],
        out_specs=pl.BlockSpec((tb, L), lambda i: (i, 0)),
        compiler_params=pltpu.CompilerParams(
            dimension_semantics=("parallel",),
        ),
        input_output_aliases=({1: 0} if in_place else {}),
    )(bounds, flat)

    return out_flat.reshape(-1)[:total].reshape(B, N, 4)


if __name__ == "__main__":
    key = jax.random.PRNGKey(0)
    k_boxes, k_img = jax.random.split(key)

    B, N = 2, 8
    C, H, W = 4, 16, 16

    # Boxes deliberately outside the image bounds so clipping matters.
    boxes = jax.random.uniform(
        k_boxes, (B, N, 4), dtype=jnp.float32, minval=-10.0, maxval=30.0
    )
    img = jax.random.normal(k_img, (B, C, H, W), dtype=jnp.float32)

    out = jax.block_until_ready(clip_boxes(boxes, img))

    # Reference (same semantics as the PyTorch module).
    ref = jnp.stack(
        [
            jnp.maximum(boxes[:, :, 0], 0.0),
            jnp.maximum(boxes[:, :, 1], 0.0),
            jnp.minimum(boxes[:, :, 2], float(W - 1)),
            jnp.minimum(boxes[:, :, 3], float(H - 1)),
        ],
        axis=-1,
    )

    assert out.shape == boxes.shape and out.dtype == boxes.dtype
    assert jnp.allclose(out, ref), "mismatch vs reference"
    print("KERNEL_OK")
</pallas_src>

<mosaic_0001>
module attributes {stable_mosaic.version = 11 : i64} {
  func.func @_clip_boxes_kernel(%arg0: i32, %arg1: memref<2xf32, #tpu.memory_space<smem>>, %arg2: memref<1x512xf32, #tpu.memory_space<vmem>>, %arg3: memref<1x512xf32, #tpu.memory_space<vmem>>) attributes {dimension_semantics = [#tpu.dimension_semantics<parallel>], iteration_bounds = array<i64: 1>, scalar_prefetch = 0 : i64, scratch_operands = 0 : i64, tpu.core_type = #tpu.core_type<tc>, window_params = [{transform_indices = @transform_0, window_bounds = array<i64: 2>}, {transform_indices = @transform_1, window_bounds = array<i64: 1, 512>}, {transform_indices = @transform_2, window_bounds = array<i64: 1, 512>}]} {
    %c0 = arith.constant 0 : index
    %c0_0 = arith.constant 0 : index
    %0 = vector.load %arg2[%c0, %c0_0] : memref<1x512xf32, #tpu.memory_space<vmem>>, vector<1x512xf32>
    %c0_1 = arith.constant 0 : index
    %1 = memref.load %arg1[%c0_1] : memref<2xf32, #tpu.memory_space<smem>>
    %c1 = arith.constant 1 : index
    %2 = memref.load %arg1[%c1] : memref<2xf32, #tpu.memory_space<smem>>
    %3 = tpu.iota {dimensions = array<i32: 1>} : vector<1x512xi32>
    %c3_i32 = arith.constant 3 : i32
    %4 = vector.broadcast %c3_i32 : i32 to vector<1x512xi32>
    %5 = arith.andi %3, %4 : vector<1x512xi32>
    %c2_i32 = arith.constant 2 : i32
    %6 = vector.broadcast %c2_i32 : i32 to vector<1x512xi32>
    %7 = arith.cmpi slt, %5, %6 : vector<1x512xi32>
    %cst = arith.constant 0.000000e+00 : f32
    %cst_2 = arith.constant 0xFF800000 : f32
    %8 = vector.broadcast %cst : f32 to vector<1x512xf32>
    %9 = vector.broadcast %cst_2 : f32 to vector<1x512xf32>
    %10 = arith.select %7, %8, %9 : vector<1x512xi1>, vector<1x512xf32>
    %c2_i32_3 = arith.constant 2 : i32
    %11 = vector.broadcast %c2_i32_3 : i32 to vector<1x512xi32>
    %12 = arith.cmpi eq, %5, %11 : vector<1x512xi32>
    %c3_i32_4 = arith.constant 3 : i32
    %13 = vector.broadcast %c3_i32_4 : i32 to vector<1x512xi32>
    %14 = arith.cmpi eq, %5, %13 : vector<1x512xi32>
    %cst_5 = arith.constant 0x7F800000 : f32
    %15 = vector.broadcast %2 : f32 to vector<1x512xf32>
    %16 = vector.broadcast %cst_5 : f32 to vector<1x512xf32>
    %17 = arith.select %14, %15, %16 : vector<1x512xi1>, vector<1x512xf32>
    %18 = vector.broadcast %1 : f32 to vector<1x512xf32>
    %19 = arith.select %12, %18, %17 : vector<1x512xi1>, vector<1x512xf32>
    %20 = arith.maximumf %0, %10 : vector<1x512xf32>
    %21 = arith.minimumf %20, %19 : vector<1x512xf32>
    %c0_6 = arith.constant 0 : index
    %c0_7 = arith.constant 0 : index
    %22 = vector.load %arg3[%c0_6, %c0_7] : memref<1x512xf32, #tpu.memory_space<vmem>>, vector<1x512xf32>
    tpu.vector_store %arg3[%c0_6, %c0_7], %21 {strides = array<i32>} : memref<1x512xf32, #tpu.memory_space<vmem>>, vector<1x512xf32>,
    return
  }
  func.func @transform_0(%arg0: i32) -> i32 {
    %c0_i32 = arith.constant 0 : i32
    %c0_i32_0 = arith.constant 0 : i32
    return %c0_i32 : i32
  }
  func.func @transform_1(%arg0: i32) -> (i32, i32) {
    %c0_i32 = arith.constant 0 : i32
    %c0_i32_0 = arith.constant 0 : i32
    return %arg0, %c0_i32 : i32, i32
  }
  func.func @transform_2(%arg0: i32) -> (i32, i32) {
    %c0_i32 = arith.constant 0 : i32
    %c0_i32_0 = arith.constant 0 : i32
    return %arg0, %c0_i32 : i32, i32
  }
}

</mosaic_0001>

<llo_original>
// kernel: tpu_custom_call.1
$region0: #{tpu_custom_call.1}
  #allocation0 [shape = 'u32[]', space=smem, size = 0x4, offset = 0x4, fixed_abs, tag = 'smem constant byte address 0x4 - core index']
  #allocation1 [shape = 'u32[144,128]{1,0:T(1,128)}', space=vmem, size = 0x12000, scoped, tag = 'internal scratch']
  %s0 = inlined_call_operand.hbm [shape: f32[2], index: 0, kind: input, shape index: {}]
  %s1 = inlined_call_operand.hbm [shape: f32[1,512], index: 1, kind: input, shape index: {}]
  %s2 = inlined_call_operand.hbm [shape: f32[1,512], index: 2, kind: output, shape index: {}]
  %s3 = sld [smem:[#allocation0]]
  $region26: #{tpu_custom_call.1} parent=0
    _
  %s5 = ssub.s32 1, %s3
  %s6 = scalar_select 0, %s5, %s3
  $region1: #{tpu_custom_call.1} parent=0
    #allocation2 [shape = 'u8[512]{0}', space=smem, size = 0x200, scoped, tag = 'input window, operand 0, single buffered']
    #allocation3 [shape = 's32[1]{0}', space=sflag, size = 0x4, scoped, tag = 'scoped memory for tpu_custom_call.1']
    #allocation4 [shape = 's32[1]{0}', space=sflag, size = 0x4, scoped, tag = 'scoped memory for tpu_custom_call.1']
    #allocation5 [shape = 's32[1]{0}', space=sflag, size = 0x4, scoped, tag = 'scoped memory for tpu_custom_call.1']
    #allocation6 [shape = 'u8[2048]{0}', space=vmem, size = 0x800, scoped, tag = 'input window, operand 1, single buffered']
    #allocation7 [shape = 'u8[2048]{0}', space=vmem, size = 0x800, scoped, tag = 'output window, operand 0, single buffered']
    %7 = vsyncpa [#allocation5], 0
    %8 = vsyncpa [#allocation3], 0
    %9 = vsyncpa [#allocation4], 0
    // Predicated region
    $region2: #{tpu_custom_call.1} parent=1 // pred_check
      _
    $region3: #{tpu_custom_call.1} parent=1 // pred_check_branch
      %11 = sbr.rel (0) target = $region5
    $region4: #{tpu_custom_call.1} parent=1 // pred_region
      %s13 = ssub.s32 16, 16
      %14 = vsyncadd [#allocation5], %s13
      %17 = dma.hbm_to_smem %s0, 16, [#allocation2], [#allocation5]
    $region5: #{tpu_custom_call.1} parent=1 // pred_fallthru
      _
    // Predicated region
    $region6: #{tpu_custom_call.1} parent=1 // pred_check
      _
    $region7: #{tpu_custom_call.1} parent=1 // pred_check_branch
      %19 = sbr.rel (0) target = $region9
    $region8: #{tpu_custom_call.1} parent=1 // pred_region
      %s21 = ssub.s32 64, 64
      %22 = vsyncadd [#allocation3], %s21
      %s24 = sshll.u32 [#allocation6], 4
      %s25 = int_to_ptr.vmem [resolvable:$true] %s24
      %27 = dma.hbm_to_vmem [thread:$0]  %s1, 64, %s25, [#allocation3]
    $region9: #{tpu_custom_call.1} parent=1 // pred_fallthru
      _
    // Predicated region
    $region10: #{tpu_custom_call.1} parent=1 // pred_check
      _
    $region11: #{tpu_custom_call.1} parent=1 // pred_check_branch
      %29 = sbr.rel (0) target = $region13
    $region12: #{tpu_custom_call.1} parent=1 // pred_region
      %30 = dma.done [#allocation5], 16
    $region13: #{tpu_custom_call.1} parent=1 // pred_fallthru
      _
    // Predicated region
    $region14: #{tpu_custom_call.1} parent=1 // pred_check
      _
    $region15: #{tpu_custom_call.1} parent=1 // pred_check_branch
      %32 = sbr.rel (0) target = $region17
    $region16: #{tpu_custom_call.1} parent=1 // pred_region
      %33 = dma.done [#allocation3], 64
    $region17: #{tpu_custom_call.1} parent=1 // pred_fallthru
      _
    %34 = sfence
    %v35 = vld [vmem:[#allocation6] sm:$0xf]
    %s36 = sld [smem:[#allocation2]]
    %s37 = sld [smem:[#allocation2 + $0x1]]
    %v38 = vlaneseq
    %v39 = vand.u32 %v38, 127
    %v40 = vadd.s32 %v39, 128
    %v41 = vadd.s32 %v39, 256
    %v42 = vadd.s32 %v39, 384
    %v43 = vand.u32 %v39, 3
    %v44 = vand.u32 %v40, 3
    %v45 = vand.u32 %v41, 3
    %v46 = vand.u32 %v42, 3
    %vm47 = vcmp.lt.s32.totalorder %v43, 2
    %vm48 = vcmp.lt.s32.totalorder %v44, 2
    %vm49 = vcmp.lt.s32.totalorder %v45, 2
    %vm50 = vcmp.lt.s32.totalorder %v46, 2
    %v51 = vsel %vm47, 0.0, -inf
    %v52 = vsel %vm48, 0.0, -inf
    %v53 = vsel %vm49, 0.0, -inf
    %v54 = vsel %vm50, 0.0, -inf
    %vm55 = vcmp.eq.s32.totalorder %v43, 2
    %vm56 = vcmp.eq.s32.totalorder %v44, 2
    %vm57 = vcmp.eq.s32.totalorder %v45, 2
    %vm58 = vcmp.eq.s32.totalorder %v46, 2
    %vm59 = vcmp.eq.s32.totalorder %v43, 3
    %vm60 = vcmp.eq.s32.totalorder %v44, 3
    %vm61 = vcmp.eq.s32.totalorder %v45, 3
    %vm62 = vcmp.eq.s32.totalorder %v46, 3
    %v63 = vstv %s37
    %v64 = vsel %vm59, %v63, inf
    %v65 = vsel %vm60, %v63, inf
    %v66 = vsel %vm61, %v63, inf
    %v67 = vsel %vm62, %v63, inf
    %v68 = vstv %s36
    %v69 = vsel %vm55, %v68, %v64
    %v70 = vsel %vm56, %v68, %v65
    %v71 = vsel %vm57, %v68, %v66
    %v72 = vsel %vm58, %v68, %v67
    %v77 = vcombine.low %v51, %v52
    %v78 = vcombine.low %v53, %v54
    %v80 = vunpack.c.l.s4 1966171168
    %v81 = vunpack.c.0.s8 %v80
    %v82 = vlaneseq
    %v83 = vshrl.u32 %v82, 7
    %v84 = vsub.s32 %v81, %v83
    %v85 = vrot.slane %v77, %v84
    %v87 = vunpack.c.l.s4 1966171168
    %v88 = vunpack.c.0.s8 %v87
    %v89 = vlaneseq
    %v90 = vshrl.u32 %v89, 7
    %v91 = vsub.s32 %v88, %v90
    %v92 = vrot.slane %v78, %v91
    %v93 = vcombine.low %v85, %v92
    %v95 = vunpack.c.l.s4 1966171168
    %v96 = vunpack.c.0.s8 %v95
    %v97 = vlaneseq
    %v98 = vshrl.u32 %v97, 7
    %v99 = vsub.s32 %v96, %v98
    %v100 = vrot.slane %v93, %v99
    %v102 = vmax.f32 %v35, %v100
    %v107 = vcombine.low %v69, %v70
    %v108 = vcombine.low %v71, %v72
    %v110 = vunpack.c.l.s4 1966171168
    %v111 = vunpack.c.0.s8 %v110
    %v112 = vlaneseq
    %v113 = vshrl.u32 %v112, 7
    %v114 = vsub.s32 %v111, %v113
    %v115 = vrot.slane %v107, %v114
    %v117 = vunpack.c.l.s4 1966171168
    %v118 = vunpack.c.0.s8 %v117
    %v119 = vlaneseq
    %v120 = vshrl.u32 %v119, 7
    %v121 = vsub.s32 %v118, %v120
    %v122 = vrot.slane %v108, %v121
    %v123 = vcombine.low %v115, %v122
    %v125 = vunpack.c.l.s4 1966171168
    %v126 = vunpack.c.0.s8 %v125
    %v127 = vlaneseq
    %v128 = vshrl.u32 %v127, 7
    %v129 = vsub.s32 %v126, %v128
    %v130 = vrot.slane %v123, %v129
    %v132 = vmin.f32 %v102, %v130
    %v133 = vlaneseq
    %vm134 = vcmp.ge.s32.totalorder %v133, 0
    %vm135 = vcmp.lt.s32.totalorder %v133, 512
    %vm136 = vmand %vm134, %vm135
    %137 = vst.msk [vmem:[#allocation7] sm:$0xf] %vm136, %v132
    // Predicated region
    $region18: #{tpu_custom_call.1} parent=1 // pred_check
      _
    $region19: #{tpu_custom_call.1} parent=1 // pred_check_branch
      %139 = sbr.rel (0) target = $region21
    $region20: #{tpu_custom_call.1} parent=1 // pred_region
      %s141 = ssub.s32 64, 64
      %142 = vsyncadd [#allocation4], %s141
      %s144 = sshll.u32 [#allocation7], 4
      %s145 = int_to_ptr.vmem [resolvable:$true] %s144
      %147 = dma.vmem_to_hbm [thread:$0]  %s145, 64, %s2, [#allocation4]
    $region21: #{tpu_custom_call.1} parent=1 // pred_fallthru
      _
    // Predicated region
    $region22: #{tpu_custom_call.1} parent=1 // pred_check
      _
    $region23: #{tpu_custom_call.1} parent=1 // pred_check_branch
      %149 = sbr.rel (0) target = $region25
    $region24: #{tpu_custom_call.1} parent=1 // pred_region
      %150 = dma.done [#allocation4], 64
    $region25: #{tpu_custom_call.1} parent=1 // pred_fallthru
      _
    %151 = vsyncpa [#allocation3], 1
    %152 = vsyncpa [#allocation4], 1
    %153 = vsyncpa [#allocation5], 1

</llo_original>
